<compile_context>
chip_gen: v6e
topology: v6e:2x2x1
jax: 0.10.0
libtpu: 0.0.40
codegen_flags: <defaults>
</compile_context>

<pallas_src>
import functools

import jax
import jax.numpy as jnp
from jax.experimental import pallas as pl
from jax.experimental.pallas import tpu as pltpu


def _textual_only_kernel(x_ref, w1_ref, b1_ref, w2_ref, b2_ref, out_ref,
                         acc_ref, *, seq_len):
    # x_ref: [TB, TS, D]   w1_ref: [D, H]  b1_ref: [1, H]
    # w2_ref: [H, C]       b2_ref: [1, C]  out_ref: [TB, C]  acc_ref: [TB, D] f32
    s = pl.program_id(1)

    @pl.when(s == 0)
    def _init():
        acc_ref[...] = jnp.zeros_like(acc_ref)

    # Running sum over this sequence tile; accumulate in f32 regardless of
    # the input dtype (works for bf16 streaming inputs too).
    acc_ref[...] += jnp.sum(x_ref[...], axis=1, dtype=jnp.float32)

    @pl.when(s == pl.num_programs(1) - 1)
    def _finalize():
        # One tiny scale on [TB, D] instead of a per-element divide on the
        # full [TB, TS, D] stream.
        pooled = acc_ref[...] * jnp.float32(1.0 / seq_len)            # [TB, D]

        # fc: Linear(D -> H)
        h = jnp.dot(pooled, w1_ref[...].astype(jnp.float32),
                    preferred_element_type=jnp.float32)
        h = h + b1_ref[...].astype(jnp.float32)                        # [TB, H]

        # classifier: Linear(H -> 3)
        logits = jnp.dot(h, w2_ref[...].astype(jnp.float32),
                         preferred_element_type=jnp.float32)
        logits = logits + b2_ref[...].astype(jnp.float32)              # [TB, C]

        out_ref[...] = logits.astype(out_ref.dtype)


def _pick_tiles(B, S, D, itemsize, max_block_bytes=4 << 20):
    """Pick (TB, TS) so one x block is large (good HBM streaming) but a
    double-buffered pair stays well under the VMEM budget on every TPU gen.

    Constraints honored:
      * TB == B or TB % 8 == 0  (output block (TB, C) second-to-last dim)
      * TS == S or TS % 8 == 0  (x block second-to-last dim); D stays full.
    """
    tb_candidates = [d for d in range(B, 0, -1)
                     if B % d == 0 and (d == B or d % 8 == 0)]
    ts_candidates = [d for d in range(S, 0, -1)
                     if S % d == 0 and (d == S or d % 8 == 0)]
    if not tb_candidates:
        tb_candidates = [B]
    if not ts_candidates:
        ts_candidates = [S]
    for tb in tb_candidates:
        for ts in ts_candidates:
            if tb * ts * D * itemsize <= max_block_bytes:
                return tb, ts
    return tb_candidates[-1], ts_candidates[-1]


def textual_only_forward(last_hidden_state, w_fc, b_fc, w_cls, b_cls,
                         *, tb=None, ts=None):
    """Pallas implementation of TextualOnlyModel.forward (post-transformer part).

    last_hidden_state: [B, S, D] (f32 or bf16)
    w_fc:  [D, H], b_fc: [H]        (stored [in, out]; == torch x @ W.T + b)
    w_cls: [H, C], b_cls: [C]
    returns logits: [B, C] float32
    """
    B, S, D = last_hidden_state.shape
    H = w_fc.shape[1]
    C = w_cls.shape[1]

    itemsize = jnp.dtype(last_hidden_state.dtype).itemsize
    auto_tb, auto_ts = _pick_tiles(B, S, D, itemsize)
    tb = auto_tb if tb is None else tb
    ts = auto_ts if ts is None else ts
    assert B % tb == 0 and S % ts == 0, (B, S, tb, ts)

    # Biases as 2-D rows so they broadcast cleanly inside the kernel.
    b_fc2 = b_fc.reshape(1, H)
    b_cls2 = b_cls.reshape(1, C)

    grid = (B // tb, S // ts)
    kernel = functools.partial(_textual_only_kernel, seq_len=S)

    return pl.pallas_call(
        kernel,
        out_shape=jax.ShapeDtypeStruct((B, C), jnp.float32),
        grid_spec=pltpu.PrefetchScalarGridSpec(
            num_scalar_prefetch=0,
            grid=grid,
            in_specs=[
                # Streamed input tile over (batch, seq).
                pl.BlockSpec((tb, ts, D), lambda b, s: (b, s, 0)),
                # Weights / biases: constant block index -> VMEM-resident,
                # DMA'd once instead of once per grid step.
                pl.BlockSpec((D, H), lambda b, s: (0, 0)),
                pl.BlockSpec((1, H), lambda b, s: (0, 0)),
                pl.BlockSpec((H, C), lambda b, s: (0, 0)),
                pl.BlockSpec((1, C), lambda b, s: (0, 0)),
            ],
            # Same output block across the seq axis -> resident accumulator
            # pattern; written only at the final seq step.
            out_specs=pl.BlockSpec((tb, C), lambda b, s: (b, 0)),
            scratch_shapes=[pltpu.VMEM((tb, D), jnp.float32)],
        ),
        compiler_params=pltpu.CompilerParams(
            # batch axis parallel (megacore on v7x), seq axis is the reduction.
            dimension_semantics=("parallel", "arbitrary"),
            # Explicit, generation-safe budget: ~4 MiB blocks double-buffered
            # plus weights/accumulator fit easily; 48 MiB is below v7x's
            # 64 MiB physical VMEM and above the v5e/v6e scoped defaults.
            vmem_limit_bytes=48 * 1024 * 1024,
        ),
    )(last_hidden_state, w_fc, b_fc2, w_cls, b_cls2)


def reference_forward(last_hidden_state, w_fc, b_fc, w_cls, b_cls):
    pooled = jnp.mean(last_hidden_state.astype(jnp.float32), axis=1)
    h = pooled @ w_fc + b_fc
    return h @ w_cls + b_cls


if __name__ == "__main__":
    key = jax.random.PRNGKey(0)

    # ---- Test 1: small shapes consistent with the module's forward ----------
    #   batch=2, seq=8, textual hidden dim=32, fc hidden=32, classes=3
    B, S, D, HID, NUM_CLASSES = 2, 8, 32, 32, 3
    k_x, k_w1, k_b1, k_w2, k_b2, k_x2 = jax.random.split(key, 6)

    # Stand-in for textual_model(**text_inputs).last_hidden_state
    last_hidden_state = jax.random.normal(k_x, (B, S, D), dtype=jnp.float32)

    # nn.Linear(D, HID) and nn.Linear(HID, 3) parameters, stored as [in, out].
    w_fc = jax.random.normal(k_w1, (D, HID), dtype=jnp.float32) * 0.05
    b_fc = jax.random.normal(k_b1, (HID,), dtype=jnp.float32) * 0.05
    w_cls = jax.random.normal(k_w2, (HID, NUM_CLASSES), dtype=jnp.float32) * 0.05
    b_cls = jax.random.normal(k_b2, (NUM_CLASSES,), dtype=jnp.float32) * 0.05

    logits = textual_only_forward(last_hidden_state, w_fc, b_fc, w_cls, b_cls)
    logits = jax.block_until_ready(logits)

    ref = reference_forward(last_hidden_state, w_fc, b_fc, w_cls, b_cls)
    assert logits.shape == (B, NUM_CLASSES), logits.shape
    assert jnp.allclose(logits, ref, atol=1e-5, rtol=1e-5), (logits, ref)

    # ---- Test 2: exercise the tiled streaming-reduction path ----------------
    # Small but multi-step grid over the sequence axis (grid = (1, 4)).
    B2, S2, D2 = 8, 64, 128
    x2 = jax.random.normal(k_x2, (B2, S2, D2), dtype=jnp.float32)
    w_fc2 = jax.random.normal(k_w1, (D2, HID), dtype=jnp.float32) * 0.05

    logits2 = textual_only_forward(x2, w_fc2, b_fc, w_cls, b_cls, tb=8, ts=16)
    logits2 = jax.block_until_ready(logits2)
    ref2 = reference_forward(x2, w_fc2, b_fc, w_cls, b_cls)
    assert logits2.shape == (B2, NUM_CLASSES), logits2.shape
    assert jnp.allclose(logits2, ref2, atol=1e-4, rtol=1e-4), (logits2, ref2)

    print("KERNEL_OK")
</pallas_src>

<mosaic_0001>
module attributes {stable_mosaic.version = 11 : i64} {
  func.func @_textual_only_kernel(%arg0: i32, %arg1: i32, %arg2: memref<2x8x32xf32, #tpu.memory_space<vmem>>, %arg3: memref<32x32xf32, #tpu.memory_space<vmem>>, %arg4: memref<1x32xf32, #tpu.memory_space<vmem>>, %arg5: memref<32x3xf32, #tpu.memory_space<vmem>>, %arg6: memref<1x3xf32, #tpu.memory_space<vmem>>, %arg7: memref<2x3xf32, #tpu.memory_space<vmem>>, %arg8: memref<2x32xf32, #tpu.memory_space<vmem>>) attributes {dimension_semantics = [#tpu.dimension_semantics<parallel>, #tpu.dimension_semantics<arbitrary>], iteration_bounds = array<i64: 1, 1>, scalar_prefetch = 0 : i64, scratch_operands = 1 : i64, tpu.core_type = #tpu.core_type<tc>, window_params = [{transform_indices = @transform_0, window_bounds = array<i64: 2, 8, 32>}, {pipeline_mode = #tpu.pipeline_mode<synchronous>, transform_indices = @transform_1, window_bounds = array<i64: 32, 32>}, {pipeline_mode = #tpu.pipeline_mode<synchronous>, transform_indices = @transform_2, window_bounds = array<i64: 1, 32>}, {pipeline_mode = #tpu.pipeline_mode<synchronous>, transform_indices = @transform_3, window_bounds = array<i64: 32, 3>}, {pipeline_mode = #tpu.pipeline_mode<synchronous>, transform_indices = @transform_4, window_bounds = array<i64: 1, 3>}, {transform_indices = @transform_5, window_bounds = array<i64: 2, 3>}]} {
    %c0_i32 = arith.constant 0 : i32
    %0 = arith.cmpi eq, %arg1, %c0_i32 : i32
    %1 = arith.extui %0 : i1 to i32
    %c0_i32_0 = arith.constant 0 : i32
    %2 = arith.cmpi ne, %1, %c0_i32_0 : i32
    scf.if %2 {
      %cst_9 = arith.constant 0.000000e+00 : f32
      %11 = vector.broadcast %cst_9 : f32 to vector<2x32xf32>
      %c0_10 = arith.constant 0 : index
      %c0_11 = arith.constant 0 : index
      %12 = vector.load %arg8[%c0_10, %c0_11] : memref<2x32xf32, #tpu.memory_space<vmem>>, vector<2x32xf32>
      tpu.vector_store %arg8[%c0_10, %c0_11], %11 {strides = array<i32>} : memref<2x32xf32, #tpu.memory_space<vmem>>, vector<2x32xf32>,
    } else {
    }
    %c0 = arith.constant 0 : index
    %c0_1 = arith.constant 0 : index
    %3 = vector.load %arg8[%c0, %c0_1] : memref<2x32xf32, #tpu.memory_space<vmem>>, vector<2x32xf32>
    %c0_2 = arith.constant 0 : index
    %c0_3 = arith.constant 0 : index
    %c0_4 = arith.constant 0 : index
    %4 = vector.load %arg2[%c0_2, %c0_3, %c0_4] : memref<2x8x32xf32, #tpu.memory_space<vmem>>, vector<2x8x32xf32>
    %cst = arith.constant dense<0.000000e+00> : vector<2x32xf32>
    %5 = vector.multi_reduction <add>, %4, %cst [1] : vector<2x8x32xf32> to vector<2x32xf32>
    %6 = arith.addf %3, %5 : vector<2x32xf32>
    %c0_5 = arith.constant 0 : index
    %c0_6 = arith.constant 0 : index
    %7 = vector.load %arg8[%c0_5, %c0_6] : memref<2x32xf32, #tpu.memory_space<vmem>>, vector<2x32xf32>
    tpu.vector_store %arg8[%c0_5, %c0_6], %6 {strides = array<i32>} : memref<2x32xf32, #tpu.memory_space<vmem>>, vector<2x32xf32>,
    %c0_i32_7 = arith.constant 0 : i32
    %8 = arith.cmpi eq, %arg1, %c0_i32_7 : i32
    %9 = arith.extui %8 : i1 to i32
    %c0_i32_8 = arith.constant 0 : i32
    %10 = arith.cmpi ne, %9, %c0_i32_8 : i32
    scf.if %10 {
      %c0_9 = arith.constant 0 : index
      %c0_10 = arith.constant 0 : index
      %11 = vector.load %arg8[%c0_9, %c0_10] : memref<2x32xf32, #tpu.memory_space<vmem>>, vector<2x32xf32>
      %cst_11 = arith.constant 1.250000e-01 : f32
      %12 = vector.broadcast %cst_11 : f32 to vector<2x32xf32>
      %13 = arith.mulf %11, %12 : vector<2x32xf32>
      %c0_12 = arith.constant 0 : index
      %c0_13 = arith.constant 0 : index
      %14 = vector.load %arg3[%c0_12, %c0_13] : memref<32x32xf32, #tpu.memory_space<vmem>>, vector<32x32xf32>
      %cst_14 = arith.constant dense<0.000000e+00> : vector<2x32xf32>
      %15 = tpu.matmul %13, %14, %cst_14 {dimension_numbers = #tpu.dot_dimension_numbers<[1], [0], [0], [1], [0, 0, 1, 1], [], []>} : vector<2x32xf32>, vector<32x32xf32>, vector<2x32xf32> -> vector<2x32xf32>
      %c0_15 = arith.constant 0 : index
      %c0_16 = arith.constant 0 : index
      %16 = vector.load %arg4[%c0_15, %c0_16] : memref<1x32xf32, #tpu.memory_space<vmem>>, vector<1x32xf32>
      %17 = vector.broadcast %16 : vector<1x32xf32> to vector<2x32xf32>
      %18 = arith.addf %15, %17 : vector<2x32xf32>
      %c0_17 = arith.constant 0 : index
      %c0_18 = arith.constant 0 : index
      %19 = vector.load %arg5[%c0_17, %c0_18] : memref<32x3xf32, #tpu.memory_space<vmem>>, vector<32x3xf32>
      %cst_19 = arith.constant dense<0.000000e+00> : vector<2x3xf32>
      %20 = tpu.matmul %18, %19, %cst_19 {dimension_numbers = #tpu.dot_dimension_numbers<[1], [0], [0], [1], [0, 0, 1, 1], [], []>} : vector<2x32xf32>, vector<32x3xf32>, vector<2x3xf32> -> vector<2x3xf32>
      %c0_20 = arith.constant 0 : index
      %c0_21 = arith.constant 0 : index
      %21 = vector.load %arg6[%c0_20, %c0_21] : memref<1x3xf32, #tpu.memory_space<vmem>>, vector<1x3xf32>
      %22 = vector.broadcast %21 : vector<1x3xf32> to vector<2x3xf32>
      %23 = arith.addf %20, %22 : vector<2x3xf32>
      %c0_22 = arith.constant 0 : index
      %c0_23 = arith.constant 0 : index
      %24 = vector.load %arg7[%c0_22, %c0_23] : memref<2x3xf32, #tpu.memory_space<vmem>>, vector<2x3xf32>
      tpu.vector_store %arg7[%c0_22, %c0_23], %23 {strides = array<i32>} : memref<2x3xf32, #tpu.memory_space<vmem>>, vector<2x3xf32>,
    } else {
    }
    return
  }
  func.func @transform_0(%arg0: i32, %arg1: i32) -> (i32, i32, i32) {
    %c0_i32 = arith.constant 0 : i32
    %c0_i32_0 = arith.constant 0 : i32
    return %arg0, %arg1, %c0_i32 : i32, i32, i32
  }
  func.func @transform_1(%arg0: i32, %arg1: i32) -> (i32, i32) {
    %c0_i32 = arith.constant 0 : i32
    %c0_i32_0 = arith.constant 0 : i32
    %c0_i32_1 = arith.constant 0 : i32
    return %c0_i32, %c0_i32_0 : i32, i32
  }
  func.func @transform_2(%arg0: i32, %arg1: i32) -> (i32, i32) {
    %c0_i32 = arith.constant 0 : i32
    %c0_i32_0 = arith.constant 0 : i32
    %c0_i32_1 = arith.constant 0 : i32
    return %c0_i32, %c0_i32_0 : i32, i32
  }
  func.func @transform_3(%arg0: i32, %arg1: i32) -> (i32, i32) {
    %c0_i32 = arith.constant 0 : i32
    %c0_i32_0 = arith.constant 0 : i32
    %c0_i32_1 = arith.constant 0 : i32
    return %c0_i32, %c0_i32_0 : i32, i32
  }
  func.func @transform_4(%arg0: i32, %arg1: i32) -> (i32, i32) {
    %c0_i32 = arith.constant 0 : i32
    %c0_i32_0 = arith.constant 0 : i32
    %c0_i32_1 = arith.constant 0 : i32
    return %c0_i32, %c0_i32_0 : i32, i32
  }
  func.func @transform_5(%arg0: i32, %arg1: i32) -> (i32, i32) {
    %c0_i32 = arith.constant 0 : i32
    %c0_i32_0 = arith.constant 0 : i32
    return %arg0, %c0_i32 : i32, i32
  }
}

</mosaic_0001>

<llo_original>
// kernel: tpu_custom_call.1
$region0: #{tpu_custom_call.1}
  #allocation0 [shape = 'u32[]', space=smem, size = 0x4, offset = 0x4, fixed_abs, tag = 'smem constant byte address 0x4 - core index']
  #allocation1 [shape = 'u32[144,128]{1,0:T(1,128)}', space=vmem, size = 0x12000, scoped, tag = 'internal scratch']
  #allocation2 [shape = 'f32[2,32]{1,0:T(2,128)}', space=vmem, size = 0x400, scoped, tag = 'scratch operand']
  %s0 = inlined_call_operand.hbm [shape: f32[2,8,32], index: 0, kind: input, shape index: {}]
  %s1 = inlined_call_operand.vmem [shape: f32[32,32], index: 1, kind: input, shape index: {}]
  %s2 = inlined_call_operand.vmem [shape: f32[1,32], index: 2, kind: input, shape index: {}]
  %s3 = inlined_call_operand.vmem [shape: f32[32,3], index: 3, kind: input, shape index: {}]
  %s4 = inlined_call_operand.vmem [shape: f32[1,3], index: 4, kind: input, shape index: {}]
  %s5 = inlined_call_operand.hbm [shape: f32[2,3], index: 5, kind: output, shape index: {}]
  %s6 = sld [smem:[#allocation0]]
  $region42: #{tpu_custom_call.1} parent=0
    _
  %s8 = ssub.s32 1, %s6
  %s9 = scalar_select 0, %s8, %s6
  $region1: #{tpu_custom_call.1} parent=0
    #allocation3 [shape = 'u8[8192]{0}', space=vmem, size = 0x2000, scoped, tag = 'input window, operand 0, single buffered']
    #allocation4 [shape = 's32[1]{0}', space=sflag, size = 0x4, scoped, tag = 'scoped memory for tpu_custom_call.1']
    #allocation5 [shape = 's32[1]{0}', space=sflag, size = 0x4, scoped, tag = 'scoped memory for tpu_custom_call.1']
    #allocation6 [shape = 'u8[1024]{0}', space=vmem, size = 0x400, scoped, tag = 'output window, operand 0, single buffered']
    %10 = vsyncpa [#allocation4], 0
    %11 = vsyncpa [#allocation5], 0
    // Predicated region
    $region2: #{tpu_custom_call.1} parent=1 // pred_check
      _
    $region3: #{tpu_custom_call.1} parent=1 // pred_check_branch
      %13 = sbr.rel (0) target = $region5
    $region4: #{tpu_custom_call.1} parent=1 // pred_region
      %s15 = ssub.s32 256, 256
      %16 = vsyncadd [#allocation4], %s15
      %s17 = sshll.u32 [#allocation3], 4
      %s18 = int_to_ptr.vmem [resolvable:$true] %s17
      %23 = dma.hbm_to_vmem [thread:$0]  %s0, 256, %s18, [#allocation4], 128, 128, 8
    $region5: #{tpu_custom_call.1} parent=1 // pred_fallthru
      _
    // Predicated region
    $region6: #{tpu_custom_call.1} parent=1 // pred_check
      _
    $region7: #{tpu_custom_call.1} parent=1 // pred_check_branch
      %25 = sbr.rel (0) target = $region9
    $region8: #{tpu_custom_call.1} parent=1 // pred_region
      _
    $region9: #{tpu_custom_call.1} parent=1 // pred_fallthru
      _
    // Predicated region
    $region10: #{tpu_custom_call.1} parent=1 // pred_check
      _
    $region11: #{tpu_custom_call.1} parent=1 // pred_check_branch
      %27 = sbr.rel (0) target = $region13
    $region12: #{tpu_custom_call.1} parent=1 // pred_region
      _
    $region13: #{tpu_custom_call.1} parent=1 // pred_fallthru
      _
    // Predicated region
    $region14: #{tpu_custom_call.1} parent=1 // pred_check
      _
    $region15: #{tpu_custom_call.1} parent=1 // pred_check_branch
      %29 = sbr.rel (0) target = $region17
    $region16: #{tpu_custom_call.1} parent=1 // pred_region
      _
    $region17: #{tpu_custom_call.1} parent=1 // pred_fallthru
      _
    // Predicated region
    $region18: #{tpu_custom_call.1} parent=1 // pred_check
      _
    $region19: #{tpu_custom_call.1} parent=1 // pred_check_branch
      %31 = sbr.rel (0) target = $region21
    $region20: #{tpu_custom_call.1} parent=1 // pred_region
      _
    $region21: #{tpu_custom_call.1} parent=1 // pred_fallthru
      _
    // Predicated region
    $region22: #{tpu_custom_call.1} parent=1 // pred_check
      _
    $region23: #{tpu_custom_call.1} parent=1 // pred_check_branch
      %33 = sbr.rel (0) target = $region25
    $region24: #{tpu_custom_call.1} parent=1 // pred_region
      %34 = dma.done [#allocation4], 256
    $region25: #{tpu_custom_call.1} parent=1 // pred_fallthru
      _
    %p35 = scmp.eq.s32.totalorder 0, 0
    // Predicated region
    $region26: #{tpu_custom_call.1} parent=1 // pred_check
      %p36 = pneg %p35
    $region27: #{tpu_custom_call.1} parent=1 // pred_check_branch
      %38 = sbr.rel (%p36) target = $region29
    $region28: #{tpu_custom_call.1} parent=1 // pred_region
      %vm39 = vcmask 254976
      %40 = vst.msk [vmem:[#allocation2] sm:$0x3] %vm39, 0.0
    $region29: #{tpu_custom_call.1} parent=1 // pred_fallthru
      _
    %v41 = vld [vmem:[#allocation2] sm:$0x3]
    %v42 = vld [vmem:[#allocation3] sm:$0xff]
    %v43 = vld [vmem:[#allocation3 + $0x8] sm:$0xff]
    %vm44 = vcmask 261120
    %v45 = vsel %vm44, %v42, 0.0
    %v46 = vrot.slane %v45, 4
    %v47 = vadd.f32 %v45, %v46
    %v48 = vrot.slane %v47, 2
    %v49 = vadd.f32 %v47, %v48
    %v50 = vrot.slane %v49, 1
    %v51 = vadd.f32 %v49, %v50
    %v52 = vsel %vm44, %v43, 0.0
    %v53 = vrot.slane %v52, 4
    %v54 = vadd.f32 %v52, %v53
    %v55 = vrot.slane %v54, 2
    %v56 = vadd.f32 %v54, %v55
    %v57 = vrot.slane %v56, 1
    %v58 = vadd.f32 %v56, %v57
    %vm61 = vcmask 1041409
    %v62 = vsel %vm61, %v58, %v51
    %v64 = vadd.f32 %v41, %v62
    %vm65 = vcmask 254976
    %66 = vst.msk [vmem:[#allocation2] sm:$0x3] %vm65, %v64
    // Predicated region
    $region30: #{tpu_custom_call.1} parent=1 // pred_check
      %p67 = pneg %p35
    $region31: #{tpu_custom_call.1} parent=1 // pred_check_branch
      %69 = sbr.rel (%p67) target = $region33
    $region32: #{tpu_custom_call.1} parent=1 // pred_region
      %v70 = vld [vmem:[#allocation2] sm:$0x3]
      %v71 = vmul.f32 %v70, 0.125
      %v72 = vld [vmem:[%s1] sm:$0xff]
      %v73 = vld [vmem:[%s1 + $0x8] sm:$0xff]
      %v74 = vld [vmem:[%s1 + $0x10] sm:$0xff]
      %v75 = vld [vmem:[%s1 + $0x18] sm:$0xff]
      %v76 = vld [vmem:[%s2] sm:$0x1]
      %v78 = vlaneseq
      %v79 = vshrl.u32 %v78, 7
      %v80 = vsub.s32 0, %v79
      %v81 = vrot.slane %v76, %v80
      %v84 = vsel %vm44, %v71, 0
      %86 = vmatprep.subr.mxu0 0.0
      %87 = vmatpush1.msra.mxu0 0.0
      %88 = vmatprep.subr.mxu0 0.0
      %89 = vmatpush1.msra.mxu0 0.0
      %90 = vmatprep.subr.mxu0 0.0
      %91 = vmatpush1.msra.mxu0 0.0
      %92 = vmatprep.subr.mxu0 0.0
      %93 = vmatpush1.msra.mxu0 0.0
      %94 = vmatprep.subr.mxu0 0.0
      %95 = vmatpush1.msra.mxu0 0.0
      %96 = vmatprep.subr.mxu0 0.0
      %97 = vmatpush1.msra.mxu0 0.0
      %98 = vmatprep.subr.mxu0 0.0
      %99 = vmatpush1.msra.mxu0 0.0
      %100 = vmatprep.subr.mxu0 0.0
      %101 = vmatpush1.msra.mxu0 0.0
      %102 = vmatprep.subr.mxu0 0.0
      %103 = vmatpush1.msra.mxu0 0.0
      %104 = vmatprep.subr.mxu0 0.0
      %105 = vmatpush1.msra.mxu0 0.0
      %106 = vmatprep.subr.mxu0 0.0
      %107 = vmatpush1.msra.mxu0 0.0
      %108 = vmatprep.subr.mxu0 0.0
      %109 = vmatpush1.msra.mxu0 0.0
      %110 = vmatprep.subr.mxu0 0.0
      %111 = vmatpush1.msra.mxu0 %v75
      %112 = vmatprep.subr.mxu0 0.0
      %113 = vmatpush1.msra.mxu0 %v74
      %114 = vmatprep.subr.mxu0 0.0
      %115 = vmatpush1.msra.mxu0 %v73
      %116 = vmatprep.subr.mxu0 0.0
      %117 = vmatpush1.msra.mxu0 %v72
      %118 = vmatprep.subr.mxu0 0.0
      %119 = vmatpush2.msra.mxu0 0.0
      %120 = vmatprep.subr.mxu0 0.0
      %121 = vmatpush2.msra.mxu0 0.0
      %122 = vmatprep.subr.mxu0 0.0
      %123 = vmatpush2.msra.mxu0 0.0
      %124 = vmatprep.subr.mxu0 0.0
      %125 = vmatpush2.msra.mxu0 0.0
      %126 = vmatprep.subr.mxu0 0.0
      %127 = vmatpush2.msra.mxu0 0.0
      %128 = vmatprep.subr.mxu0 0.0
      %129 = vmatpush2.msra.mxu0 0.0
      %130 = vmatprep.subr.mxu0 0.0
      %131 = vmatpush2.msra.mxu0 0.0
      %132 = vmatprep.subr.mxu0 0.0
      %133 = vmatpush2.msra.mxu0 0.0
      %134 = vmatprep.subr.mxu0 0.0
      %135 = vmatpush2.msra.mxu0 0.0
      %136 = vmatprep.subr.mxu0 0.0
      %137 = vmatpush2.msra.mxu0 0.0
      %138 = vmatprep.subr.mxu0 0.0
      %139 = vmatpush2.msra.mxu0 0.0
      %140 = vmatprep.subr.mxu0 0.0
      %141 = vmatpush2.msra.mxu0 0.0
      %142 = vmatprep.subr.mxu0 0.0
      %143 = vmatpush2.msra.mxu0 0.0
      %144 = vmatprep.subr.mxu0 0.0
      %145 = vmatpush2.msra.mxu0 0.0
      %146 = vmatprep.subr.mxu0 0.0
      %147 = vmatpush2.msra.mxu0 0.0
      %148 = vmatprep.subr.mxu0 0.0
      %149 = vmatpush2.msra.mxu0 0.0
      %150 = vmatprep.mubr.f32.mxu0 0.0
      %151 = vmatmul.mubr.f32.gmra.mxu0 %v84
      %v152 = vpop.f32.mrf.mxu0
      %v153 = vadd.f32 %v81, %v152
      %v154 = vpop.f32.mrf.mxu0
      %155 = vdwg.mxu0
      %v156 = vld [vmem:[%s3] sm:$0xff]
      %v157 = vld [vmem:[%s3 + $0x8] sm:$0xff]
      %v158 = vld [vmem:[%s3 + $0x10] sm:$0xff]
      %v159 = vld [vmem:[%s3 + $0x18] sm:$0xff]
      %v160 = vld [vmem:[%s4] sm:$0x1]
      %v162 = vlaneseq
      %v163 = vshrl.u32 %v162, 7
      %v164 = vsub.s32 0, %v163
      %v165 = vrot.slane %v160, %v164
      %v168 = vsel %vm44, %v153, 0
      %170 = vmatprep.subr.mxu0 0.0
      %171 = vmatpush1.msra.mxu0 0.0
      %172 = vmatprep.subr.mxu0 0.0
      %173 = vmatpush1.msra.mxu0 0.0
      %174 = vmatprep.subr.mxu0 0.0
      %175 = vmatpush1.msra.mxu0 0.0
      %176 = vmatprep.subr.mxu0 0.0
      %177 = vmatpush1.msra.mxu0 0.0
      %178 = vmatprep.subr.mxu0 0.0
      %179 = vmatpush1.msra.mxu0 0.0
      %180 = vmatprep.subr.mxu0 0.0
      %181 = vmatpush1.msra.mxu0 0.0
      %182 = vmatprep.subr.mxu0 0.0
      %183 = vmatpush1.msra.mxu0 0.0
      %184 = vmatprep.subr.mxu0 0.0
      %185 = vmatpush1.msra.mxu0 0.0
      %186 = vmatprep.subr.mxu0 0.0
      %187 = vmatpush1.msra.mxu0 0.0
      %188 = vmatprep.subr.mxu0 0.0
      %189 = vmatpush1.msra.mxu0 0.0
      %190 = vmatprep.subr.mxu0 0.0
      %191 = vmatpush1.msra.mxu0 0.0
      %192 = vmatprep.subr.mxu0 0.0
      %193 = vmatpush1.msra.mxu0 0.0
      %194 = vmatprep.subr.mxu0 0.0
      %195 = vmatpush1.msra.mxu0 %v159
      %196 = vmatprep.subr.mxu0 0.0
      %197 = vmatpush1.msra.mxu0 %v158
      %198 = vmatprep.subr.mxu0 0.0
      %199 = vmatpush1.msra.mxu0 %v157
      %200 = vmatprep.subr.mxu0 0.0
      %201 = vmatpush1.msra.mxu0 %v156
      %202 = vmatprep.subr.mxu0 0.0
      %203 = vmatpush2.msra.mxu0 0.0
      %204 = vmatprep.subr.mxu0 0.0
      %205 = vmatpush2.msra.mxu0 0.0
      %206 = vmatprep.subr.mxu0 0.0
      %207 = vmatpush2.msra.mxu0 0.0
      %208 = vmatprep.subr.mxu0 0.0
      %209 = vmatpush2.msra.mxu0 0.0
      %210 = vmatprep.subr.mxu0 0.0
      %211 = vmatpush2.msra.mxu0 0.0
      %212 = vmatprep.subr.mxu0 0.0
      %213 = vmatpush2.msra.mxu0 0.0
      %214 = vmatprep.subr.mxu0 0.0
      %215 = vmatpush2.msra.mxu0 0.0
      %216 = vmatprep.subr.mxu0 0.0
      %217 = vmatpush2.msra.mxu0 0.0
      %218 = vmatprep.subr.mxu0 0.0
      %219 = vmatpush2.msra.mxu0 0.0
      %220 = vmatprep.subr.mxu0 0.0
      %221 = vmatpush2.msra.mxu0 0.0
      %222 = vmatprep.subr.mxu0 0.0
      %223 = vmatpush2.msra.mxu0 0.0
      %224 = vmatprep.subr.mxu0 0.0
      %225 = vmatpush2.msra.mxu0 0.0
      %226 = vmatprep.subr.mxu0 0.0
      %227 = vmatpush2.msra.mxu0 0.0
      %228 = vmatprep.subr.mxu0 0.0
      %229 = vmatpush2.msra.mxu0 0.0
      %230 = vmatprep.subr.mxu0 0.0
      %231 = vmatpush2.msra.mxu0 0.0
      %232 = vmatprep.subr.mxu0 0.0
      %233 = vmatpush2.msra.mxu0 0.0
      %234 = vmatprep.mubr.f32.mxu0 0.0
      %235 = vmatmul.mubr.f32.gmra.mxu0 %v168
      %v236 = vpop.f32.mrf.mxu0
      %v237 = vadd.f32 %v165, %v236
      %v238 = vpop.f32.mrf.mxu0
      %239 = vdwg.mxu0
      %vm240 = vcmask 17408
      %241 = vst.msk [vmem:[#allocation6] sm:$0x3] %vm240, %v237
    $region33: #{tpu_custom_call.1} parent=1 // pred_fallthru
      _
    // Predicated region
    $region34: #{tpu_custom_call.1} parent=1 // pred_check
      _
    $region35: #{tpu_custom_call.1} parent=1 // pred_check_branch
      %243 = sbr.rel (0) target = $region37
    $region36: #{tpu_custom_call.1} parent=1 // pred_region
      %s245 = ssub.s32 32, 32
      %246 = vsyncadd [#allocation5], %s245
      %s248 = sshll.u32 [#allocation6], 4
      %s249 = int_to_ptr.vmem [resolvable:$true] %s248
      %251 = dma.vmem_to_hbm [thread:$0]  %s249, 32, %s5, [#allocation5]
    $region37: #{tpu_custom_call.1} parent=1 // pred_fallthru
      _
    // Predicated region
    $region38: #{tpu_custom_call.1} parent=1 // pred_check
      _
    $region39: #{tpu_custom_call.1} parent=1 // pred_check_branch
      %253 = sbr.rel (0) target = $region41
    $region40: #{tpu_custom_call.1} parent=1 // pred_region
      %254 = dma.done [#allocation5], 32
    $region41: #{tpu_custom_call.1} parent=1 // pred_fallthru
      _
    %255 = vsyncpa [#allocation4], 1
    %256 = vsyncpa [#allocation5], 1

</llo_original>
